<compile_context>
chip_gen: v5e
topology: v5e:2x2
jax: 0.10.0
libtpu: 0.0.40
codegen_flags: <defaults>
</compile_context>

<pallas_src>
import functools

import jax
import jax.numpy as jnp
from jax.experimental import pallas as pl
from jax.experimental.pallas import tpu as pltpu


def _stgcn_fused_kernel(x_ref, w1_ref, b1_ref, w2_ref, b2_ref, w3_ref, b3_ref,
                        wfc_ref, bfc_ref, o_ref, *, n, t):
    """Fused STGCN forward. Everything stays in VMEM / vregs.

    x_ref:   (N*T, Cin)      channels-last input slab (V squeezed, A folded)
    w*_ref:  (Cin_l, Cout_l) 1x1-conv weights, channels-last, A pre-folded
    b*_ref:  (1, Cout_l)
    wfc_ref: (C3, Kp)        final Linear weight, lane-padded to Kp (mult of 128)
    bfc_ref: (1, Kp)
    o_ref:   (N, Kp)         lane-dense logits (wrapper slices back to K)
    """
    cin = x_ref.shape[1]

    # Layer 1 (+ReLU): contraction K = Cin (tiny) -> VPU broadcast-FMA chain,
    # keeping the MXU out of the prologue's latency chain.
    x = x_ref[...]                                   # (M, Cin)
    h = x[:, 0:1] * w1_ref[0:1, :]                   # (M, C1)
    for c in range(1, cin):                          # static unroll, Cin small
        h = h + x[:, c:c + 1] * w1_ref[c:c + 1, :]
    h = jnp.maximum(h + b1_ref[...], 0.0)

    # Layers 2 and 3 (+ReLU) on the folded (N*T, C) slab — lane-dense, MXU dots
    # with f32 accumulation, never stored to VMEM scratch or HBM.
    h = jnp.maximum(
        jnp.dot(h, w2_ref[...], preferred_element_type=jnp.float32) + b2_ref[...], 0.0)
    h = jnp.maximum(
        jnp.dot(h, w3_ref[...], preferred_element_type=jnp.float32) + b3_ref[...], 0.0)

    # Temporal mean pooling: tile-aligned sublane reduction (XLU), then the
    # lane-dense FC epilogue.
    feat = h.reshape(n, t, h.shape[1]).sum(axis=1) * (1.0 / t)      # (N, C3)
    logits = jnp.dot(feat, wfc_ref[...],
                     preferred_element_type=jnp.float32) + bfc_ref[...]  # (N, Kp)
    o_ref[...] = logits.astype(o_ref.dtype)


def stgcn_forward(x_nctv, params):
    """x_nctv: (N, C, T, V), exactly the PyTorch module's input layout."""
    N, Cin, T, V = x_nctv.shape
    assert V == 1, "fc = nn.Linear(256, num_classes) requires 256*V == 256, i.e. V == 1"

    # Fold the (1, 1) adjacency gain into every layer's conv weight (free
    # wrapper-side plumbing; the kernel never sees A).
    a = params["A"][0, 0]
    W1 = a * params["W1"]
    W2 = a * params["W2"]
    W3 = a * params["W3"]
    b1, b2, b3 = params["b1"], params["b2"], params["b3"]
    Wfc, bfc = params["Wfc"], params["bfc"]

    C3 = W3.shape[1]
    K = Wfc.shape[1]

    # Lane-pad the FC weights so the kernel writes an unmasked (N, Kp) output.
    Kp = ((K + 127) // 128) * 128
    Wfc_p = jnp.zeros((C3, Kp), Wfc.dtype).at[:, :K].set(Wfc)
    bfc_p = jnp.zeros((1, Kp), bfc.dtype).at[:, :K].set(bfc)

    # NCHW -> channels-last done once in the wrapper; fold N into the matmul M
    # dimension so the kernel sees a single (N*T, Cin) slab.
    x_flat = jnp.transpose(x_nctv.reshape(N, Cin, T), (0, 2, 1)).reshape(N * T, Cin)

    kernel = functools.partial(_stgcn_fused_kernel, n=N, t=T)
    vmem_spec = pl.BlockSpec(memory_space=pltpu.MemorySpace.VMEM)

    # Single fused kernel, no grid: everything VMEM-resident, no pipeline
    # prologue/epilogue for a 1-step grid.
    out_p = pl.pallas_call(
        kernel,
        out_shape=jax.ShapeDtypeStruct((N, Kp), x_nctv.dtype),
        in_specs=[vmem_spec] * 9,
        out_specs=vmem_spec,
    )(x_flat, W1, b1, W2, b2, W3, b3, Wfc_p, bfc_p)

    return out_p[:, :K]


def reference_forward(x, params):
    """Plain-JAX transcription of the PyTorch forward (NCHW layout)."""
    A = params["A"]

    def gc_relu(x, W, b):
        x = jnp.einsum("nctv,vw->nctw", x, A)
        x = jnp.einsum("nctv,co->notv", x, W) + b.reshape(1, -1, 1, 1)
        return jnp.maximum(x, 0.0)

    x = gc_relu(x, params["W1"], params["b1"])
    x = gc_relu(x, params["W2"], params["b2"])
    x = gc_relu(x, params["W3"], params["b3"])
    x = jnp.mean(x, axis=2)                 # (N, 256, V)
    x = x.reshape(x.shape[0], -1)           # (N, 256*V); valid only for V == 1
    return x @ params["Wfc"] + params["bfc"]


if __name__ == "__main__":
    # Small shapes consistent with the module. V = 1 because the module's
    # fc = nn.Linear(256, num_classes) requires the flattened dim 256*V == 256.
    N, C_in, T, V = 2, 4, 8, 1
    C1, C2, C3 = 64, 128, 256
    num_classes = 10

    keys = jax.random.split(jax.random.PRNGKey(0), 10)
    x = jax.random.normal(keys[0], (N, C_in, T, V), jnp.float32)

    params = {
        "A": jax.random.normal(keys[1], (V, V), jnp.float32),
        # Conv2d(., ., kernel_size=(1, 1)) weights stored pre-transposed as (Cin, Cout).
        "W1": 0.1 * jax.random.normal(keys[2], (C_in, C1), jnp.float32),
        "b1": 0.1 * jax.random.normal(keys[3], (1, C1), jnp.float32),
        "W2": 0.1 * jax.random.normal(keys[4], (C1, C2), jnp.float32),
        "b2": 0.1 * jax.random.normal(keys[5], (1, C2), jnp.float32),
        "W3": 0.1 * jax.random.normal(keys[6], (C2, C3), jnp.float32),
        "b3": 0.1 * jax.random.normal(keys[7], (1, C3), jnp.float32),
        # nn.Linear(256, num_classes) weight stored pre-transposed as (256*V, num_classes).
        "Wfc": 0.05 * jax.random.normal(keys[8], (C3 * V, num_classes), jnp.float32),
        "bfc": 0.05 * jax.random.normal(keys[9], (1, num_classes), jnp.float32),
    }

    out = jax.jit(stgcn_forward)(x, params)
    out = jax.block_until_ready(out)

    ref = reference_forward(x, params)
    assert out.shape == (N, num_classes), out.shape
    assert jnp.allclose(out, ref, rtol=1e-3, atol=1e-3), float(jnp.max(jnp.abs(out - ref)))

    print("KERNEL_OK")
</pallas_src>

<mosaic_0001>
module attributes {stable_mosaic.version = 11 : i64} {
  func.func @_stgcn_fused_kernel(%arg0: memref<16x4xf32, #tpu.memory_space<vmem>>, %arg1: memref<4x64xf32, #tpu.memory_space<vmem>>, %arg2: memref<1x64xf32, #tpu.memory_space<vmem>>, %arg3: memref<64x128xf32, #tpu.memory_space<vmem>>, %arg4: memref<1x128xf32, #tpu.memory_space<vmem>>, %arg5: memref<128x256xf32, #tpu.memory_space<vmem>>, %arg6: memref<1x256xf32, #tpu.memory_space<vmem>>, %arg7: memref<256x128xf32, #tpu.memory_space<vmem>>, %arg8: memref<1x128xf32, #tpu.memory_space<vmem>>, %arg9: memref<2x128xf32, #tpu.memory_space<vmem>>) attributes {dimension_semantics = [], scalar_prefetch = 0 : i64, scratch_operands = 0 : i64, tpu.core_type = #tpu.core_type<tc>} {
    %c0 = arith.constant 0 : index
    %c0_0 = arith.constant 0 : index
    %0 = vector.load %arg0[%c0, %c0_0] : memref<16x4xf32, #tpu.memory_space<vmem>>, vector<16x4xf32>
    %1 = vector.extract_strided_slice %0 {offsets = [0, 0], sizes = [16, 1], strides = [1, 1]} : vector<16x4xf32> to vector<16x1xf32>
    %c0_1 = arith.constant 0 : index
    %c0_2 = arith.constant 0 : index
    %2 = vector.load %arg1[%c0_1, %c0_2] : memref<4x64xf32, #tpu.memory_space<vmem>>, vector<1x64xf32>
    %3 = vector.broadcast %1 : vector<16x1xf32> to vector<16x64xf32>
    %4 = vector.broadcast %2 : vector<1x64xf32> to vector<16x64xf32>
    %5 = arith.mulf %3, %4 : vector<16x64xf32>
    %6 = vector.extract_strided_slice %0 {offsets = [0, 1], sizes = [16, 1], strides = [1, 1]} : vector<16x4xf32> to vector<16x1xf32>
    %c1 = arith.constant 1 : index
    %c0_3 = arith.constant 0 : index
    %7 = vector.load %arg1[%c1, %c0_3] : memref<4x64xf32, #tpu.memory_space<vmem>>, vector<1x64xf32>
    %8 = vector.broadcast %6 : vector<16x1xf32> to vector<16x64xf32>
    %9 = vector.broadcast %7 : vector<1x64xf32> to vector<16x64xf32>
    %10 = arith.mulf %8, %9 : vector<16x64xf32>
    %11 = arith.addf %5, %10 : vector<16x64xf32>
    %12 = vector.extract_strided_slice %0 {offsets = [0, 2], sizes = [16, 1], strides = [1, 1]} : vector<16x4xf32> to vector<16x1xf32>
    %c2 = arith.constant 2 : index
    %c0_4 = arith.constant 0 : index
    %13 = vector.load %arg1[%c2, %c0_4] : memref<4x64xf32, #tpu.memory_space<vmem>>, vector<1x64xf32>
    %14 = vector.broadcast %12 : vector<16x1xf32> to vector<16x64xf32>
    %15 = vector.broadcast %13 : vector<1x64xf32> to vector<16x64xf32>
    %16 = arith.mulf %14, %15 : vector<16x64xf32>
    %17 = arith.addf %11, %16 : vector<16x64xf32>
    %18 = vector.extract_strided_slice %0 {offsets = [0, 3], sizes = [16, 1], strides = [1, 1]} : vector<16x4xf32> to vector<16x1xf32>
    %c3 = arith.constant 3 : index
    %c0_5 = arith.constant 0 : index
    %19 = vector.load %arg1[%c3, %c0_5] : memref<4x64xf32, #tpu.memory_space<vmem>>, vector<1x64xf32>
    %20 = vector.broadcast %18 : vector<16x1xf32> to vector<16x64xf32>
    %21 = vector.broadcast %19 : vector<1x64xf32> to vector<16x64xf32>
    %22 = arith.mulf %20, %21 : vector<16x64xf32>
    %23 = arith.addf %17, %22 : vector<16x64xf32>
    %c0_6 = arith.constant 0 : index
    %c0_7 = arith.constant 0 : index
    %24 = vector.load %arg2[%c0_6, %c0_7] : memref<1x64xf32, #tpu.memory_space<vmem>>, vector<1x64xf32>
    %25 = vector.broadcast %24 : vector<1x64xf32> to vector<16x64xf32>
    %26 = arith.addf %23, %25 : vector<16x64xf32>
    %cst = arith.constant 0.000000e+00 : f32
    %27 = vector.broadcast %cst : f32 to vector<16x64xf32>
    %28 = arith.maximumf %26, %27 : vector<16x64xf32>
    %c0_8 = arith.constant 0 : index
    %c0_9 = arith.constant 0 : index
    %29 = vector.load %arg3[%c0_8, %c0_9] : memref<64x128xf32, #tpu.memory_space<vmem>>, vector<64x128xf32>
    %cst_10 = arith.constant dense<0.000000e+00> : vector<16x128xf32>
    %30 = tpu.matmul %28, %29, %cst_10 {dimension_numbers = #tpu.dot_dimension_numbers<[1], [0], [0], [1], [0, 0, 1, 1], [], []>} : vector<16x64xf32>, vector<64x128xf32>, vector<16x128xf32> -> vector<16x128xf32>
    %c0_11 = arith.constant 0 : index
    %c0_12 = arith.constant 0 : index
    %31 = vector.load %arg4[%c0_11, %c0_12] : memref<1x128xf32, #tpu.memory_space<vmem>>, vector<1x128xf32>
    %32 = vector.broadcast %31 : vector<1x128xf32> to vector<16x128xf32>
    %33 = arith.addf %30, %32 : vector<16x128xf32>
    %cst_13 = arith.constant 0.000000e+00 : f32
    %34 = vector.broadcast %cst_13 : f32 to vector<16x128xf32>
    %35 = arith.maximumf %33, %34 : vector<16x128xf32>
    %c0_14 = arith.constant 0 : index
    %c0_15 = arith.constant 0 : index
    %36 = vector.load %arg5[%c0_14, %c0_15] : memref<128x256xf32, #tpu.memory_space<vmem>>, vector<128x256xf32>
    %cst_16 = arith.constant dense<0.000000e+00> : vector<16x256xf32>
    %37 = tpu.matmul %35, %36, %cst_16 {dimension_numbers = #tpu.dot_dimension_numbers<[1], [0], [0], [1], [0, 0, 1, 1], [], []>} : vector<16x128xf32>, vector<128x256xf32>, vector<16x256xf32> -> vector<16x256xf32>
    %c0_17 = arith.constant 0 : index
    %c0_18 = arith.constant 0 : index
    %38 = vector.load %arg6[%c0_17, %c0_18] : memref<1x256xf32, #tpu.memory_space<vmem>>, vector<1x256xf32>
    %39 = vector.broadcast %38 : vector<1x256xf32> to vector<16x256xf32>
    %40 = arith.addf %37, %39 : vector<16x256xf32>
    %cst_19 = arith.constant 0.000000e+00 : f32
    %41 = vector.broadcast %cst_19 : f32 to vector<16x256xf32>
    %42 = arith.maximumf %40, %41 : vector<16x256xf32>
    %43 = vector.shape_cast %42 : vector<16x256xf32> to vector<2x8x256xf32>
    %cst_20 = arith.constant dense<0.000000e+00> : vector<2x256xf32>
    %44 = vector.multi_reduction <add>, %43, %cst_20 [1] : vector<2x8x256xf32> to vector<2x256xf32>
    %cst_21 = arith.constant 1.250000e-01 : f32
    %45 = vector.broadcast %cst_21 : f32 to vector<2x256xf32>
    %46 = arith.mulf %44, %45 : vector<2x256xf32>
    %c0_22 = arith.constant 0 : index
    %c0_23 = arith.constant 0 : index
    %47 = vector.load %arg7[%c0_22, %c0_23] : memref<256x128xf32, #tpu.memory_space<vmem>>, vector<256x128xf32>
    %cst_24 = arith.constant dense<0.000000e+00> : vector<2x128xf32>
    %48 = tpu.matmul %46, %47, %cst_24 {dimension_numbers = #tpu.dot_dimension_numbers<[1], [0], [0], [1], [0, 0, 1, 1], [], []>} : vector<2x256xf32>, vector<256x128xf32>, vector<2x128xf32> -> vector<2x128xf32>
    %c0_25 = arith.constant 0 : index
    %c0_26 = arith.constant 0 : index
    %49 = vector.load %arg8[%c0_25, %c0_26] : memref<1x128xf32, #tpu.memory_space<vmem>>, vector<1x128xf32>
    %50 = vector.broadcast %49 : vector<1x128xf32> to vector<2x128xf32>
    %51 = arith.addf %48, %50 : vector<2x128xf32>
    %c0_27 = arith.constant 0 : index
    %c0_28 = arith.constant 0 : index
    %52 = vector.load %arg9[%c0_27, %c0_28] : memref<2x128xf32, #tpu.memory_space<vmem>>, vector<2x128xf32>
    tpu.vector_store %arg9[%c0_27, %c0_28], %51 {strides = array<i32>} : memref<2x128xf32, #tpu.memory_space<vmem>>, vector<2x128xf32>,
    return
  }
}

</mosaic_0001>

<llo_original>
// kernel: stgcn_forward.1
$region0: #{stgcn_forward.1}
  #allocation0 [shape = 'u32[]', space=smem, size = 0x4, offset = 0x4, fixed_abs, tag = 'smem constant byte address 0x4 - core index']
  #allocation1 [shape = 'u32[72,128]{1,0:T(1,128)}', space=vmem, size = 0x9000, scoped, tag = 'internal scratch']
  %s0 = inlined_call_operand.vmem [shape: f32[16,4], index: 0, kind: input, shape index: {}]
  %s1 = inlined_call_operand.vmem [shape: f32[4,64], index: 1, kind: input, shape index: {}]
  %s2 = inlined_call_operand.vmem [shape: f32[1,64], index: 2, kind: input, shape index: {}]
  %s3 = inlined_call_operand.vmem [shape: f32[64,128], index: 3, kind: input, shape index: {}]
  %s4 = inlined_call_operand.vmem [shape: f32[1,128], index: 4, kind: input, shape index: {}]
  %s5 = inlined_call_operand.vmem [shape: f32[128,256], index: 5, kind: input, shape index: {}]
  %s6 = inlined_call_operand.vmem [shape: f32[1,256], index: 6, kind: input, shape index: {}]
  %s7 = inlined_call_operand.vmem [shape: f32[256,128], index: 7, kind: input, shape index: {}]
  %s8 = inlined_call_operand.vmem [shape: f32[1,128], index: 8, kind: input, shape index: {}]
  %s9 = inlined_call_operand.hbm [shape: f32[2,128], index: 9, kind: output, shape index: {}]
  %s10 = sld [smem:[#allocation0]]
  $region46: #{stgcn_forward.1} parent=0
    _
  %s12 = ssub.s32 1, %s10
  %s13 = scalar_select 0, %s12, %s10
  $region1: #{stgcn_forward.1} parent=0
    #allocation2 [shape = 'u8[1024]{0}', space=vmem, size = 0x400, scoped, tag = 'output window, operand 0, single buffered']
    #allocation3 [shape = 's32[1]{0}', space=sflag, size = 0x4, scoped, tag = 'scoped memory for stgcn_forward.1']
    %14 = vsyncpa [#allocation3], 0
    // Predicated region
    $region2: #{stgcn_forward.1} parent=1 // pred_check
      _
    $region3: #{stgcn_forward.1} parent=1 // pred_check_branch
      %16 = sbr.rel (0) target = $region5
    $region4: #{stgcn_forward.1} parent=1 // pred_region
      _
    $region5: #{stgcn_forward.1} parent=1 // pred_fallthru
      _
    // Predicated region
    $region6: #{stgcn_forward.1} parent=1 // pred_check
      _
    $region7: #{stgcn_forward.1} parent=1 // pred_check_branch
      %18 = sbr.rel (0) target = $region9
    $region8: #{stgcn_forward.1} parent=1 // pred_region
      _
    $region9: #{stgcn_forward.1} parent=1 // pred_fallthru
      _
    // Predicated region
    $region10: #{stgcn_forward.1} parent=1 // pred_check
      _
    $region11: #{stgcn_forward.1} parent=1 // pred_check_branch
      %20 = sbr.rel (0) target = $region13
    $region12: #{stgcn_forward.1} parent=1 // pred_region
      _
    $region13: #{stgcn_forward.1} parent=1 // pred_fallthru
      _
    // Predicated region
    $region14: #{stgcn_forward.1} parent=1 // pred_check
      _
    $region15: #{stgcn_forward.1} parent=1 // pred_check_branch
      %22 = sbr.rel (0) target = $region17
    $region16: #{stgcn_forward.1} parent=1 // pred_region
      _
    $region17: #{stgcn_forward.1} parent=1 // pred_fallthru
      _
    // Predicated region
    $region18: #{stgcn_forward.1} parent=1 // pred_check
      _
    $region19: #{stgcn_forward.1} parent=1 // pred_check_branch
      %24 = sbr.rel (0) target = $region21
    $region20: #{stgcn_forward.1} parent=1 // pred_region
      _
    $region21: #{stgcn_forward.1} parent=1 // pred_fallthru
      _
    // Predicated region
    $region22: #{stgcn_forward.1} parent=1 // pred_check
      _
    $region23: #{stgcn_forward.1} parent=1 // pred_check_branch
      %26 = sbr.rel (0) target = $region25
    $region24: #{stgcn_forward.1} parent=1 // pred_region
      _
    $region25: #{stgcn_forward.1} parent=1 // pred_fallthru
      _
    // Predicated region
    $region26: #{stgcn_forward.1} parent=1 // pred_check
      _
    $region27: #{stgcn_forward.1} parent=1 // pred_check_branch
      %28 = sbr.rel (0) target = $region29
    $region28: #{stgcn_forward.1} parent=1 // pred_region
      _
    $region29: #{stgcn_forward.1} parent=1 // pred_fallthru
      _
    // Predicated region
    $region30: #{stgcn_forward.1} parent=1 // pred_check
      _
    $region31: #{stgcn_forward.1} parent=1 // pred_check_branch
      %30 = sbr.rel (0) target = $region33
    $region32: #{stgcn_forward.1} parent=1 // pred_region
      _
    $region33: #{stgcn_forward.1} parent=1 // pred_fallthru
      _
    // Predicated region
    $region34: #{stgcn_forward.1} parent=1 // pred_check
      _
    $region35: #{stgcn_forward.1} parent=1 // pred_check_branch
      %32 = sbr.rel (0) target = $region37
    $region36: #{stgcn_forward.1} parent=1 // pred_region
      _
    $region37: #{stgcn_forward.1} parent=1 // pred_fallthru
      _
    %v33 = vld [vmem:[%s0] sm:$0xff]
    %v34 = vld [vmem:[%s0 + $0x8] sm:$0xff]
    %v35 = vld [vmem:[%s1] sm:$0x1]
    %37 = vset.pattern.permute.xlu0 0
    %38 = vperm.xlu0 %37, %v33
    %v39 = vpop.permute.xlu0 %38
    %42 = vset.pattern.permute.xlu0 0
    %43 = vperm.xlu0 %42, %v34
    %v44 = vpop.permute.xlu0 %43
    %v46 = vperm.slane %v35, 0
    %v47 = vmul.f32 %v39, %v46
    %v48 = vmul.f32 %v44, %v46
    %v49 = vld [vmem:[%s1 + $0x1] sm:$0x1]
    %50 = vset.pattern.permute.xlu0 1
    %51 = vperm.xlu0 %50, %v33
    %v52 = vpop.permute.xlu0 %51
    %54 = vset.pattern.permute.xlu0 1
    %55 = vperm.xlu0 %54, %v34
    %v56 = vpop.permute.xlu0 %55
    %v58 = vperm.slane %v49, 0
    %v59 = vmul.f32 %v52, %v58
    %v60 = vmul.f32 %v56, %v58
    %v61 = vadd.f32 %v47, %v59
    %v62 = vadd.f32 %v48, %v60
    %v63 = vld [vmem:[%s1 + $0x2] sm:$0x1]
    %64 = vset.pattern.permute.xlu0 2
    %65 = vperm.xlu0 %64, %v33
    %v66 = vpop.permute.xlu0 %65
    %68 = vset.pattern.permute.xlu0 2
    %69 = vperm.xlu0 %68, %v34
    %v70 = vpop.permute.xlu0 %69
    %v72 = vperm.slane %v63, 0
    %v73 = vmul.f32 %v66, %v72
    %v74 = vmul.f32 %v70, %v72
    %v75 = vadd.f32 %v61, %v73
    %v76 = vadd.f32 %v62, %v74
    %v77 = vld [vmem:[%s1 + $0x3] sm:$0x1]
    %78 = vset.pattern.permute.xlu0 3
    %79 = vperm.xlu0 %78, %v33
    %v80 = vpop.permute.xlu0 %79
    %82 = vset.pattern.permute.xlu0 3
    %83 = vperm.xlu0 %82, %v34
    %v84 = vpop.permute.xlu0 %83
    %v86 = vperm.slane %v77, 0
    %v87 = vmul.f32 %v80, %v86
    %v88 = vmul.f32 %v84, %v86
    %v89 = vadd.f32 %v75, %v87
    %v90 = vadd.f32 %v76, %v88
    %v91 = vld [vmem:[%s2] sm:$0x1]
    %v93 = vperm.slane %v91, 0
    %v95 = vadd.f32 %v89, %v93
    %v96 = vadd.f32 %v90, %v93
    %v97 = vmax.f32 %v95, 0.0
    %v98 = vmax.f32 %v96, 0.0
    %v99 = vld [vmem:[%s3] sm:$0xff]
    %v100 = vld [vmem:[%s3 + $0x8] sm:$0xff]
    %v101 = vld [vmem:[%s3 + $0x10] sm:$0xff]
    %v102 = vld [vmem:[%s3 + $0x18] sm:$0xff]
    %v103 = vld [vmem:[%s3 + $0x20] sm:$0xff]
    %v104 = vld [vmem:[%s3 + $0x28] sm:$0xff]
    %v105 = vld [vmem:[%s3 + $0x30] sm:$0xff]
    %v106 = vld [vmem:[%s3 + $0x38] sm:$0xff]
    %v107 = vld [vmem:[%s4] sm:$0x1]
    %v109 = vperm.slane %v107, 0
    %vm111 = vcmask 523264
    %v113 = vsel %vm111, %v97, 0
    %v116 = vsel %vm111, %v98, 0
    %118 = vmatpush.msra.mxu0 0.0
    %119 = vmatpush.msra.mxu0 0.0
    %120 = vmatpush.msra.mxu0 0.0
    %121 = vmatpush.msra.mxu0 0.0
    %122 = vmatpush.msra.mxu0 0.0
    %123 = vmatpush.msra.mxu0 0.0
    %124 = vmatpush.msra.mxu0 0.0
    %125 = vmatpush.msra.mxu0 0.0
    %126 = vmatpush.msra.mxu0 %v106
    %127 = vmatpush.msra.mxu0 %v105
    %128 = vmatpush.msra.mxu0 %v104
    %129 = vmatpush.msra.mxu0 %v103
    %130 = vmatpush.msra.mxu0 %v102
    %131 = vmatpush.msra.mxu0 %v101
    %132 = vmatpush.msra.mxu0 %v100
    %133 = vmatpush.msra.mxu0 %v99
    %134 = vmatmul.f32.gmra.mxu0 %v113
    %v135 = vpop.f32.mrf.mxu0
    %v136 = vadd.f32 %v109, %v135
    %137 = vmatmul.f32.gmra.mxu0 %v116
    %v138 = vpop.f32.mrf.mxu0
    %v139 = vadd.f32 %v109, %v138
    %140 = vdwg.mxu0
    %v141 = vmax.f32 %v136, 0.0
    %v142 = vmax.f32 %v139, 0.0
    %v143 = vld [vmem:[%s5] sm:$0xff]
    %v144 = vld [vmem:[%s5 + $0x8] sm:$0xff]
    %v145 = vld [vmem:[%s5 + $0x10] sm:$0xff]
    %v146 = vld [vmem:[%s5 + $0x18] sm:$0xff]
    %v147 = vld [vmem:[%s5 + $0x20] sm:$0xff]
    %v148 = vld [vmem:[%s5 + $0x28] sm:$0xff]
    %v149 = vld [vmem:[%s5 + $0x30] sm:$0xff]
    %v150 = vld [vmem:[%s5 + $0x38] sm:$0xff]
    %v151 = vld [vmem:[%s5 + $0x40] sm:$0xff]
    %v152 = vld [vmem:[%s5 + $0x48] sm:$0xff]
    %v153 = vld [vmem:[%s5 + $0x50] sm:$0xff]
    %v154 = vld [vmem:[%s5 + $0x58] sm:$0xff]
    %v155 = vld [vmem:[%s5 + $0x60] sm:$0xff]
    %v156 = vld [vmem:[%s5 + $0x68] sm:$0xff]
    %v157 = vld [vmem:[%s5 + $0x70] sm:$0xff]
    %v158 = vld [vmem:[%s5 + $0x78] sm:$0xff]
    %v159 = vld [vmem:[%s5 + $0x80] sm:$0xff]
    %v160 = vld [vmem:[%s5 + $0x88] sm:$0xff]
    %v161 = vld [vmem:[%s5 + $0x90] sm:$0xff]
    %v162 = vld [vmem:[%s5 + $0x98] sm:$0xff]
    %v163 = vld [vmem:[%s5 + $0xa0] sm:$0xff]
    %v164 = vld [vmem:[%s5 + $0xa8] sm:$0xff]
    %v165 = vld [vmem:[%s5 + $0xb0] sm:$0xff]
    %v166 = vld [vmem:[%s5 + $0xb8] sm:$0xff]
    %v167 = vld [vmem:[%s5 + $0xc0] sm:$0xff]
    %v168 = vld [vmem:[%s5 + $0xc8] sm:$0xff]
    %v169 = vld [vmem:[%s5 + $0xd0] sm:$0xff]
    %v170 = vld [vmem:[%s5 + $0xd8] sm:$0xff]
    %v171 = vld [vmem:[%s5 + $0xe0] sm:$0xff]
    %v172 = vld [vmem:[%s5 + $0xe8] sm:$0xff]
    %v173 = vld [vmem:[%s5 + $0xf0] sm:$0xff]
    %v174 = vld [vmem:[%s5 + $0xf8] sm:$0xff]
    %v175 = vld [vmem:[%s6] sm:$0x3]
    %v177 = vperm.slane %v175, 0
    %v178 = vperm.slane %v175, 1
    %181 = vmatpush.msra.mxu0 %v173
    %182 = vmatpush.msra.mxu0 %v171
    %183 = vmatpush.msra.mxu0 %v169
    %184 = vmatpush.msra.mxu0 %v167
    %185 = vmatpush.msra.mxu0 %v165
    %186 = vmatpush.msra.mxu0 %v163
    %187 = vmatpush.msra.mxu0 %v161
    %188 = vmatpush.msra.mxu0 %v159
    %189 = vmatpush.msra.mxu0 %v157
    %190 = vmatpush.msra.mxu0 %v155
    %191 = vmatpush.msra.mxu0 %v153
    %192 = vmatpush.msra.mxu0 %v151
    %193 = vmatpush.msra.mxu0 %v149
    %194 = vmatpush.msra.mxu0 %v147
    %195 = vmatpush.msra.mxu0 %v145
    %196 = vmatpush.msra.mxu0 %v143
    %197 = vmatmul.f32.gmra.mxu0 %v141
    %v198 = vpop.f32.mrf.mxu0
    %v199 = vadd.f32 %v177, %v198
    %200 = vmatmul.f32.gmra.mxu0 %v142
    %v201 = vpop.f32.mrf.mxu0
    %v202 = vadd.f32 %v177, %v201
    %203 = vdwg.mxu0
    %204 = vmatpush.msra.mxu0 %v174
    %205 = vmatpush.msra.mxu0 %v172
    %206 = vmatpush.msra.mxu0 %v170
    %207 = vmatpush.msra.mxu0 %v168
    %208 = vmatpush.msra.mxu0 %v166
    %209 = vmatpush.msra.mxu0 %v164
    %210 = vmatpush.msra.mxu0 %v162
    %211 = vmatpush.msra.mxu0 %v160
    %212 = vmatpush.msra.mxu0 %v158
    %213 = vmatpush.msra.mxu0 %v156
    %214 = vmatpush.msra.mxu0 %v154
    %215 = vmatpush.msra.mxu0 %v152
    %216 = vmatpush.msra.mxu0 %v150
    %217 = vmatpush.msra.mxu0 %v148
    %218 = vmatpush.msra.mxu0 %v146
    %219 = vmatpush.msra.mxu0 %v144
    %220 = vmatmul.f32.gmra.mxu0 %v141
    %v221 = vpop.f32.mrf.mxu0
    %v222 = vadd.f32 %v178, %v221
    %223 = vmatmul.f32.gmra.mxu0 %v142
    %v224 = vpop.f32.mrf.mxu0
    %v225 = vadd.f32 %v178, %v224
    %226 = vdwg.mxu0
    %v227 = vmax.f32 %v199, 0.0
    %v228 = vmax.f32 %v222, 0.0
    %v229 = vmax.f32 %v202, 0.0
    %v230 = vmax.f32 %v225, 0.0
    %v231 = vrot.slane %v227, 4
    %v232 = vadd.f32 %v227, %v231
    %v233 = vrot.slane %v232, 2
    %v234 = vadd.f32 %v232, %v233
    %v235 = vrot.slane %v234, 1
    %v236 = vadd.f32 %v234, %v235
    %v237 = vrot.slane %v228, 4
    %v238 = vadd.f32 %v228, %v237
    %v239 = vrot.slane %v238, 2
    %v240 = vadd.f32 %v238, %v239
    %v241 = vrot.slane %v240, 1
    %v242 = vadd.f32 %v240, %v241
    %v243 = vrot.slane %v229, 4
    %v244 = vadd.f32 %v229, %v243
    %v245 = vrot.slane %v244, 2
    %v246 = vadd.f32 %v244, %v245
    %v247 = vrot.slane %v246, 1
    %v248 = vadd.f32 %v246, %v247
    %v249 = vrot.slane %v230, 4
    %v250 = vadd.f32 %v230, %v249
    %v251 = vrot.slane %v250, 2
    %v252 = vadd.f32 %v250, %v251
    %v253 = vrot.slane %v252, 1
    %v254 = vadd.f32 %v252, %v253
    %v255 = vmul.f32 %v236, 0.125
    %v256 = vmul.f32 %v242, 0.125
    %v257 = vmul.f32 %v248, 0.125
    %v258 = vmul.f32 %v254, 0.125
    %v259 = vld [vmem:[%s7] sm:$0xff]
    %v260 = vld [vmem:[%s7 + $0x8] sm:$0xff]
    %v261 = vld [vmem:[%s7 + $0x10] sm:$0xff]
    %v262 = vld [vmem:[%s7 + $0x18] sm:$0xff]
    %v263 = vld [vmem:[%s7 + $0x20] sm:$0xff]
    %v264 = vld [vmem:[%s7 + $0x28] sm:$0xff]
    %v265 = vld [vmem:[%s7 + $0x30] sm:$0xff]
    %v266 = vld [vmem:[%s7 + $0x38] sm:$0xff]
    %v267 = vld [vmem:[%s7 + $0x40] sm:$0xff]
    %v268 = vld [vmem:[%s7 + $0x48] sm:$0xff]
    %v269 = vld [vmem:[%s7 + $0x50] sm:$0xff]
    %v270 = vld [vmem:[%s7 + $0x58] sm:$0xff]
    %v271 = vld [vmem:[%s7 + $0x60] sm:$0xff]
    %v272 = vld [vmem:[%s7 + $0x68] sm:$0xff]
    %v273 = vld [vmem:[%s7 + $0x70] sm:$0xff]
    %v274 = vld [vmem:[%s7 + $0x78] sm:$0xff]
    %v275 = vld [vmem:[%s7 + $0x80] sm:$0xff]
    %v276 = vld [vmem:[%s7 + $0x88] sm:$0xff]
    %v277 = vld [vmem:[%s7 + $0x90] sm:$0xff]
    %v278 = vld [vmem:[%s7 + $0x98] sm:$0xff]
    %v279 = vld [vmem:[%s7 + $0xa0] sm:$0xff]
    %v280 = vld [vmem:[%s7 + $0xa8] sm:$0xff]
    %v281 = vld [vmem:[%s7 + $0xb0] sm:$0xff]
    %v282 = vld [vmem:[%s7 + $0xb8] sm:$0xff]
    %v283 = vld [vmem:[%s7 + $0xc0] sm:$0xff]
    %v284 = vld [vmem:[%s7 + $0xc8] sm:$0xff]
    %v285 = vld [vmem:[%s7 + $0xd0] sm:$0xff]
    %v286 = vld [vmem:[%s7 + $0xd8] sm:$0xff]
    %v287 = vld [vmem:[%s7 + $0xe0] sm:$0xff]
    %v288 = vld [vmem:[%s7 + $0xe8] sm:$0xff]
    %v289 = vld [vmem:[%s7 + $0xf0] sm:$0xff]
    %v290 = vld [vmem:[%s7 + $0xf8] sm:$0xff]
    %v291 = vld [vmem:[%s8] sm:$0x1]
    %v293 = vperm.slane %v291, 0
    %vm299 = vcmask 1041409
    %v300 = vsel %vm299, %v257, %v255
    %v301 = vsel %vm299, %v258, %v256
    %304 = vmatpush.msra.mxu0 %v274
    %305 = vmatpush.msra.mxu0 %v273
    %306 = vmatpush.msra.mxu0 %v272
    %307 = vmatpush.msra.mxu0 %v271
    %308 = vmatpush.msra.mxu0 %v270
    %309 = vmatpush.msra.mxu0 %v269
    %310 = vmatpush.msra.mxu0 %v268
    %311 = vmatpush.msra.mxu0 %v267
    %312 = vmatpush.msra.mxu0 %v266
    %313 = vmatpush.msra.mxu0 %v265
    %314 = vmatpush.msra.mxu0 %v264
    %315 = vmatpush.msra.mxu0 %v263
    %316 = vmatpush.msra.mxu0 %v262
    %317 = vmatpush.msra.mxu0 %v261
    %318 = vmatpush.msra.mxu0 %v260
    %319 = vmatpush.msra.mxu0 %v259
    %320 = vmatmul.f32.gmra.mxu0 %v300
    %v321 = vpop.f32.mrf.mxu0
    %v322 = vadd.f32 %v293, %v321
    %323 = vdwg.mxu0
    %324 = vmatpush.msra.mxu0 %v290
    %325 = vmatpush.msra.mxu0 %v289
    %326 = vmatpush.msra.mxu0 %v288
    %327 = vmatpush.msra.mxu0 %v287
    %328 = vmatpush.msra.mxu0 %v286
    %329 = vmatpush.msra.mxu0 %v285
    %330 = vmatpush.msra.mxu0 %v284
    %331 = vmatpush.msra.mxu0 %v283
    %332 = vmatpush.msra.mxu0 %v282
    %333 = vmatpush.msra.mxu0 %v281
    %334 = vmatpush.msra.mxu0 %v280
    %335 = vmatpush.msra.mxu0 %v279
    %336 = vmatpush.msra.mxu0 %v278
    %337 = vmatpush.msra.mxu0 %v277
    %338 = vmatpush.msra.mxu0 %v276
    %339 = vmatpush.msra.mxu0 %v275
    %340 = vmatmul.f32.gmra.mxu0 %v301
    %v341 = vpop.f32.mrf.mxu0
    %v342 = vadd.f32 %v322, %v341
    %343 = vdwg.mxu0
    %344 = vst [vmem:[#allocation2] sm:$0x3] %v342
    // Predicated region
    $region38: #{stgcn_forward.1} parent=1 // pred_check
      _
    $region39: #{stgcn_forward.1} parent=1 // pred_check_branch
      %346 = sbr.rel (0) target = $region41
    $region40: #{stgcn_forward.1} parent=1 // pred_region
      %348 = vsyncadd [#allocation3], 0
      %s350 = sshll.u32 [#allocation2], 4
      %s351 = int_to_ptr.vmem [resolvable:$true] %s350
      %s352 = sshll.u32 %s9, 4
      %s353 = int_to_ptr.hbm [resolvable:$true] %s352
      %355 = dma.vmem_to_hbm [thread:$0]  %s351, 32, %s353, [#allocation3]
    $region41: #{stgcn_forward.1} parent=1 // pred_fallthru
      _
    // Predicated region
    $region42: #{stgcn_forward.1} parent=1 // pred_check
      _
    $region43: #{stgcn_forward.1} parent=1 // pred_check_branch
      %357 = sbr.rel (0) target = $region45
    $region44: #{stgcn_forward.1} parent=1 // pred_region
      %359 = dma.done [#allocation3], 32
    $region45: #{stgcn_forward.1} parent=1 // pred_fallthru
      _
    %360 = vsyncpa [#allocation3], 1

</llo_original>
